<compile_context>
chip_gen: v6e
topology: v6e:2x2x1
jax: 0.10.0
libtpu: 0.0.40
codegen_flags: <defaults>
</compile_context>

<pallas_src>
import functools

import numpy as np
import jax
import jax.numpy as jnp
from jax.experimental import pallas as pl
from jax.experimental.pallas import tpu as pltpu


def _round_up(n, m):
    return ((n + m - 1) // m) * m


def _simple_nn_kernel(x_ref, w1_ref, b1_ref, w2_ref, b2_ref, out_ref):
    # Hidden layer, transposed: contract D (dim 1 of both operands) -> h^T (H_pad, TB).
    # bf16 operands, f32 accumulation on the MXU.
    h_t = jax.lax.dot_general(
        w1_ref[...], x_ref[...],
        dimension_numbers=(((1,), (1,)), ((), ())),
        preferred_element_type=jnp.float32,
    )
    h_t = jnp.maximum(h_t + b1_ref[...], 0.0)  # bias (lane-broadcast column) + ReLU, f32 VPU
    # Dropout in eval/inference mode is the identity, so it is omitted here.
    # TODO(synk): training-mode dropout (Bernoulli mask via pltpu.prng_seed /
    # pltpu.prng_random_bits) is not implemented.
    # Output layer (out_features=1) as VPU multiply + cross-sublane reduce:
    # lane-dense (1, TB) row instead of a masked (TB, 1) store.
    o = jnp.sum(h_t * w2_ref[...], axis=0, keepdims=True) + b2_ref[0]
    out_ref[...] = o.reshape(out_ref.shape).astype(out_ref.dtype)


@functools.partial(jax.jit, static_argnames=("block_b",))
def simple_nn_forward(x, w1, b1, w2, b2, *, block_b=512):
    """Eval-mode SimpleNN forward.

    x:  (B, D) f32
    Params in PyTorch nn.Linear layout:
      w1: (H, D), b1: (H,), w2: (1, H), b2: (1,)
    Returns: (B, 1) f32.
    """
    B, D = x.shape
    H = w1.shape[0]
    H_pad = _round_up(H, 128)
    # Batch tile: multiple of 128 (lane-dense output row), capped by block_b.
    tb = min(block_b, _round_up(max(B, 1), 128))
    num_tiles = -(-B // tb)
    B_pad = num_tiles * tb

    # Pad batch & hidden dims with zeros (padded hidden units contribute exactly 0);
    # cast MXU operands to bf16 (halves HBM traffic for x); biases / w2 stay f32.
    x_p = jnp.pad(x, ((0, B_pad - B), (0, 0))).astype(jnp.bfloat16)
    w1_p = jnp.pad(w1, ((0, H_pad - H), (0, 0))).astype(jnp.bfloat16)
    b1_c = jnp.pad(b1, (0, H_pad - H)).astype(jnp.float32).reshape(H_pad, 1)
    w2_c = jnp.pad(w2.reshape(-1), (0, H_pad - H)).astype(jnp.float32).reshape(H_pad, 1)
    b2_s = jnp.asarray(b2, jnp.float32).reshape(1)

    out_t = pl.pallas_call(
        _simple_nn_kernel,
        out_shape=jax.ShapeDtypeStruct((num_tiles, 1, tb), jnp.float32),
        grid_spec=pltpu.PrefetchScalarGridSpec(
            num_scalar_prefetch=0,
            grid=(num_tiles,),
            in_specs=[
                pl.BlockSpec((tb, D), lambda i: (i, 0)),        # x tile, pipelined over batch
                pl.BlockSpec((H_pad, D), lambda i: (0, 0)),     # W1, VMEM-resident
                pl.BlockSpec((H_pad, 1), lambda i: (0, 0)),     # b1 column, VMEM-resident
                pl.BlockSpec((H_pad, 1), lambda i: (0, 0)),     # w2 column, VMEM-resident
                pl.BlockSpec(memory_space=pltpu.MemorySpace.SMEM),  # b2 scalar in SMEM
            ],
            out_specs=pl.BlockSpec((1, 1, tb), lambda i: (i, 0, 0)),  # lane-dense output row
        ),
        compiler_params=pltpu.CompilerParams(
            dimension_semantics=("parallel",),
        ),
    )(x_p, w1_p, b1_c, w2_c, b2_s)

    # (num_tiles, 1, tb) -> (B_pad, 1) -> strip batch padding.
    return out_t.reshape(B_pad, 1)[:B]


def init_params(key, input_dim, hidden_dim=64):
    """Deterministic init mimicking nn.Linear (PyTorch (out, in) weight layout)."""
    k1, k2, k3, k4 = jax.random.split(key, 4)
    bound1 = 1.0 / (input_dim ** 0.5)
    bound2 = 1.0 / (hidden_dim ** 0.5)
    w1 = jax.random.uniform(k1, (hidden_dim, input_dim), jnp.float32, -bound1, bound1)
    b1 = jax.random.uniform(k2, (hidden_dim,), jnp.float32, -bound1, bound1)
    w2 = jax.random.uniform(k3, (1, hidden_dim), jnp.float32, -bound2, bound2)
    b2 = jax.random.uniform(k4, (1,), jnp.float32, -bound2, bound2)
    return w1, b1, w2, b2


if __name__ == "__main__":
    key = jax.random.PRNGKey(0)
    k_x, k_p = jax.random.split(key)

    batch, input_dim, hidden_dim = 8, 32, 64
    x = jax.random.normal(k_x, (batch, input_dim), jnp.float32)
    w1, b1, w2, b2 = init_params(k_p, input_dim, hidden_dim)

    out = jax.block_until_ready(simple_nn_forward(x, w1, b1, w2, b2))
    assert out.shape == (batch, 1)

    # Host-side f32 reference (eval-mode dropout = identity), matching the kernel's
    # bf16 matmul inputs with f32 accumulation; numpy avoids XLA matmul precision quirks.
    xb = np.asarray(x.astype(jnp.bfloat16).astype(jnp.float32))
    w1b = np.asarray(w1.astype(jnp.bfloat16).astype(jnp.float32))
    h_ref = np.maximum(xb @ w1b.T + np.asarray(b1)[None, :], 0.0)
    ref = h_ref @ np.asarray(w2).T + np.asarray(b2)[None, :]
    err = float(np.max(np.abs(np.asarray(out) - ref)))
    assert err < 1e-3, err
    print("KERNEL_OK")
</pallas_src>

<mosaic_0001>
module attributes {stable_mosaic.version = 11 : i64} {
  func.func @_simple_nn_kernel(%arg0: i32, %arg1: memref<128x32xbf16, #tpu.memory_space<vmem>>, %arg2: memref<128x32xbf16, #tpu.memory_space<vmem>>, %arg3: memref<128x1xf32, #tpu.memory_space<vmem>>, %arg4: memref<128x1xf32, #tpu.memory_space<vmem>>, %arg5: memref<1xf32, #tpu.memory_space<smem>>, %arg6: memref<1x1x128xf32, #tpu.memory_space<vmem>>) attributes {dimension_semantics = [#tpu.dimension_semantics<parallel>], iteration_bounds = array<i64: 1>, scalar_prefetch = 0 : i64, scratch_operands = 0 : i64, tpu.core_type = #tpu.core_type<tc>, window_params = [{transform_indices = @transform_0, window_bounds = array<i64: 128, 32>}, {pipeline_mode = #tpu.pipeline_mode<synchronous>, transform_indices = @transform_1, window_bounds = array<i64: 128, 32>}, {pipeline_mode = #tpu.pipeline_mode<synchronous>, transform_indices = @transform_2, window_bounds = array<i64: 128, 1>}, {pipeline_mode = #tpu.pipeline_mode<synchronous>, transform_indices = @transform_3, window_bounds = array<i64: 128, 1>}, {transform_indices = @transform_4, window_bounds = array<i64: 1>}, {transform_indices = @transform_5, window_bounds = array<i64: 1, 1, 128>}]} {
    %c0 = arith.constant 0 : index
    %c0_0 = arith.constant 0 : index
    %0 = vector.load %arg2[%c0, %c0_0] : memref<128x32xbf16, #tpu.memory_space<vmem>>, vector<128x32xbf16>
    %c0_1 = arith.constant 0 : index
    %c0_2 = arith.constant 0 : index
    %1 = vector.load %arg1[%c0_1, %c0_2] : memref<128x32xbf16, #tpu.memory_space<vmem>>, vector<128x32xbf16>
    %cst = arith.constant dense<0.000000e+00> : vector<128x128xf32>
    %2 = tpu.matmul %0, %1, %cst {dimension_numbers = #tpu.dot_dimension_numbers<[1], [1], [0], [0], [0, 0, 1, 0], [], []>} : vector<128x32xbf16>, vector<128x32xbf16>, vector<128x128xf32> -> vector<128x128xf32>
    %c0_3 = arith.constant 0 : index
    %c0_4 = arith.constant 0 : index
    %3 = vector.load %arg3[%c0_3, %c0_4] : memref<128x1xf32, #tpu.memory_space<vmem>>, vector<128x1xf32>
    %4 = vector.broadcast %3 : vector<128x1xf32> to vector<128x128xf32>
    %5 = arith.addf %2, %4 : vector<128x128xf32>
    %cst_5 = arith.constant 0.000000e+00 : f32
    %6 = vector.broadcast %cst_5 : f32 to vector<128x128xf32>
    %7 = arith.maximumf %5, %6 : vector<128x128xf32>
    %c0_6 = arith.constant 0 : index
    %c0_7 = arith.constant 0 : index
    %8 = vector.load %arg4[%c0_6, %c0_7] : memref<128x1xf32, #tpu.memory_space<vmem>>, vector<128x1xf32>
    %9 = vector.broadcast %8 : vector<128x1xf32> to vector<128x128xf32>
    %10 = arith.mulf %7, %9 : vector<128x128xf32>
    %cst_8 = arith.constant dense<0.000000e+00> : vector<128xf32>
    %11 = vector.multi_reduction <add>, %10, %cst_8 [0] : vector<128x128xf32> to vector<128xf32>
    %12 = vector.shape_cast %11 : vector<128xf32> to vector<1x128xf32>
    %c0_9 = arith.constant 0 : index
    %13 = memref.load %arg5[%c0_9] : memref<1xf32, #tpu.memory_space<smem>>
    %14 = vector.broadcast %13 : f32 to vector<1x128xf32>
    %15 = arith.addf %12, %14 : vector<1x128xf32>
    %16 = vector.shape_cast %15 : vector<1x128xf32> to vector<1x1x128xf32>
    %c0_10 = arith.constant 0 : index
    %c0_11 = arith.constant 0 : index
    %c0_12 = arith.constant 0 : index
    %17 = vector.load %arg6[%c0_10, %c0_11, %c0_12] : memref<1x1x128xf32, #tpu.memory_space<vmem>>, vector<1x1x128xf32>
    tpu.vector_store %arg6[%c0_10, %c0_11, %c0_12], %16 {strides = array<i32>} : memref<1x1x128xf32, #tpu.memory_space<vmem>>, vector<1x1x128xf32>,
    return
  }
  func.func @transform_0(%arg0: i32) -> (i32, i32) {
    %c0_i32 = arith.constant 0 : i32
    %c0_i32_0 = arith.constant 0 : i32
    return %arg0, %c0_i32 : i32, i32
  }
  func.func @transform_1(%arg0: i32) -> (i32, i32) {
    %c0_i32 = arith.constant 0 : i32
    %c0_i32_0 = arith.constant 0 : i32
    %c0_i32_1 = arith.constant 0 : i32
    return %c0_i32, %c0_i32_0 : i32, i32
  }
  func.func @transform_2(%arg0: i32) -> (i32, i32) {
    %c0_i32 = arith.constant 0 : i32
    %c0_i32_0 = arith.constant 0 : i32
    %c0_i32_1 = arith.constant 0 : i32
    return %c0_i32, %c0_i32_0 : i32, i32
  }
  func.func @transform_3(%arg0: i32) -> (i32, i32) {
    %c0_i32 = arith.constant 0 : i32
    %c0_i32_0 = arith.constant 0 : i32
    %c0_i32_1 = arith.constant 0 : i32
    return %c0_i32, %c0_i32_0 : i32, i32
  }
  func.func @transform_4(%arg0: i32) -> i32 {
    %c0_i32 = arith.constant 0 : i32
    %c0_i32_0 = arith.constant 0 : i32
    return %c0_i32 : i32
  }
  func.func @transform_5(%arg0: i32) -> (i32, i32, i32) {
    %c0_i32 = arith.constant 0 : i32
    %c0_i32_0 = arith.constant 0 : i32
    %c0_i32_1 = arith.constant 0 : i32
    return %arg0, %c0_i32, %c0_i32_0 : i32, i32, i32
  }
}

</mosaic_0001>

<llo_original>
// kernel: simple_nn_forward.1
$region0: #{simple_nn_forward.1}
  #allocation0 [shape = 'u32[]', space=smem, size = 0x4, offset = 0x4, fixed_abs, tag = 'smem constant byte address 0x4 - core index']
  #allocation1 [shape = 'u32[144,128]{1,0:T(1,128)}', space=vmem, size = 0x12000, scoped, tag = 'internal scratch']
  #allocation2 [shape = 'f32[1]{0:T(128)S(6)}', space=smem, size = 0x200, scoped, tag = 'scoped memory for simple_nn_forward.1']
  %s0 = inlined_call_operand.vmem [shape: bf16[128,32], index: 0, kind: input, shape index: {}]
  %s1 = inlined_call_operand.vmem [shape: bf16[128,32], index: 1, kind: input, shape index: {}]
  %s2 = inlined_call_operand.vmem [shape: f32[128,1], index: 2, kind: input, shape index: {}]
  %s3 = inlined_call_operand.vmem [shape: f32[128,1], index: 3, kind: input, shape index: {}]
  %s4 = inlined_call_operand.<no memory space> [shape: f32[1], index: 4, kind: input, shape index: {}]
  %s5 = inlined_call_operand.vmem [shape: f32[1,1,128], index: 5, kind: output, shape index: {}]
  %s6 = sld [smem:[#allocation0]]
  $region30: #{simple_nn_forward.1} parent=0
    _
  %s8 = ssub.s32 1, %s6
  %s9 = scalar_select 0, %s8, %s6
  %10 = sst [smem:[#allocation2]] %s4
  // Predicated region
  $region2: #{simple_nn_forward.1} parent=0 // pred_check
    _
  $region3: #{simple_nn_forward.1} parent=0 // pred_check_branch
    %12 = sbr.rel (0) target = $region5
  $region4: #{simple_nn_forward.1} parent=0 // pred_region
    _
  $region5: #{simple_nn_forward.1} parent=0 // pred_fallthru
    _
  // Predicated region
  $region6: #{simple_nn_forward.1} parent=0 // pred_check
    _
  $region7: #{simple_nn_forward.1} parent=0 // pred_check_branch
    %14 = sbr.rel (0) target = $region9
  $region8: #{simple_nn_forward.1} parent=0 // pred_region
    _
  $region9: #{simple_nn_forward.1} parent=0 // pred_fallthru
    _
  // Predicated region
  $region10: #{simple_nn_forward.1} parent=0 // pred_check
    _
  $region11: #{simple_nn_forward.1} parent=0 // pred_check_branch
    %16 = sbr.rel (0) target = $region13
  $region12: #{simple_nn_forward.1} parent=0 // pred_region
    _
  $region13: #{simple_nn_forward.1} parent=0 // pred_fallthru
    _
  // Predicated region
  $region14: #{simple_nn_forward.1} parent=0 // pred_check
    _
  $region15: #{simple_nn_forward.1} parent=0 // pred_check_branch
    %18 = sbr.rel (0) target = $region17
  $region16: #{simple_nn_forward.1} parent=0 // pred_region
    _
  $region17: #{simple_nn_forward.1} parent=0 // pred_fallthru
    _
  // Predicated region
  $region18: #{simple_nn_forward.1} parent=0 // pred_check
    _
  $region19: #{simple_nn_forward.1} parent=0 // pred_check_branch
    %20 = sbr.rel (0) target = $region21
  $region20: #{simple_nn_forward.1} parent=0 // pred_region
    _
  $region21: #{simple_nn_forward.1} parent=0 // pred_fallthru
    _
  %v22 = vld [vmem:[%s1] sm:$0xf]
  %v23 = vld [vmem:[%s1 + $0x4] sm:$0xf]
  %v24 = vld [vmem:[%s1 + $0x8] sm:$0xf]
  %v25 = vld [vmem:[%s1 + $0xc] sm:$0xf]
  %v26 = vld [vmem:[%s1 + $0x10] sm:$0xf]
  %v27 = vld [vmem:[%s1 + $0x14] sm:$0xf]
  %v28 = vld [vmem:[%s1 + $0x18] sm:$0xf]
  %v29 = vld [vmem:[%s1 + $0x1c] sm:$0xf]
  %v30 = vld [vmem:[%s1 + $0x20] sm:$0xf]
  %v31 = vld [vmem:[%s1 + $0x24] sm:$0xf]
  %v32 = vld [vmem:[%s1 + $0x28] sm:$0xf]
  %v33 = vld [vmem:[%s1 + $0x2c] sm:$0xf]
  %v34 = vld [vmem:[%s1 + $0x30] sm:$0xf]
  %v35 = vld [vmem:[%s1 + $0x34] sm:$0xf]
  %v36 = vld [vmem:[%s1 + $0x38] sm:$0xf]
  %v37 = vld [vmem:[%s1 + $0x3c] sm:$0xf]
  %v38 = vld [vmem:[%s0] sm:$0xf]
  %v39 = vld [vmem:[%s0 + $0x4] sm:$0xf]
  %v40 = vld [vmem:[%s0 + $0x8] sm:$0xf]
  %v41 = vld [vmem:[%s0 + $0xc] sm:$0xf]
  %v42 = vld [vmem:[%s0 + $0x10] sm:$0xf]
  %v43 = vld [vmem:[%s0 + $0x14] sm:$0xf]
  %v44 = vld [vmem:[%s0 + $0x18] sm:$0xf]
  %v45 = vld [vmem:[%s0 + $0x1c] sm:$0xf]
  %v46 = vld [vmem:[%s0 + $0x20] sm:$0xf]
  %v47 = vld [vmem:[%s0 + $0x24] sm:$0xf]
  %v48 = vld [vmem:[%s0 + $0x28] sm:$0xf]
  %v49 = vld [vmem:[%s0 + $0x2c] sm:$0xf]
  %v50 = vld [vmem:[%s0 + $0x30] sm:$0xf]
  %v51 = vld [vmem:[%s0 + $0x34] sm:$0xf]
  %v52 = vld [vmem:[%s0 + $0x38] sm:$0xf]
  %v53 = vld [vmem:[%s0 + $0x3c] sm:$0xf]
  %v54 = vld [vmem:[%s2] sm:$0xff]
  %v55 = vld [vmem:[%s2 + $0x8] sm:$0xff]
  %v56 = vld [vmem:[%s2 + $0x10] sm:$0xff]
  %v57 = vld [vmem:[%s2 + $0x18] sm:$0xff]
  %v58 = vld [vmem:[%s2 + $0x20] sm:$0xff]
  %v59 = vld [vmem:[%s2 + $0x28] sm:$0xff]
  %v60 = vld [vmem:[%s2 + $0x30] sm:$0xff]
  %v61 = vld [vmem:[%s2 + $0x38] sm:$0xff]
  %v62 = vld [vmem:[%s2 + $0x40] sm:$0xff]
  %v63 = vld [vmem:[%s2 + $0x48] sm:$0xff]
  %v64 = vld [vmem:[%s2 + $0x50] sm:$0xff]
  %v65 = vld [vmem:[%s2 + $0x58] sm:$0xff]
  %v66 = vld [vmem:[%s2 + $0x60] sm:$0xff]
  %v67 = vld [vmem:[%s2 + $0x68] sm:$0xff]
  %v68 = vld [vmem:[%s2 + $0x70] sm:$0xff]
  %v69 = vld [vmem:[%s2 + $0x78] sm:$0xff]
  %71 = vset.pattern.permute.xlu0 0
  %72 = vperm.xlu0 %71, %v54
  %v73 = vpop.permute.xlu0 %72
  %76 = vset.pattern.permute.xlu0 0
  %77 = vperm.xlu0 %76, %v55
  %v78 = vpop.permute.xlu0 %77
  %81 = vset.pattern.permute.xlu0 0
  %82 = vperm.xlu0 %81, %v56
  %v83 = vpop.permute.xlu0 %82
  %86 = vset.pattern.permute.xlu0 0
  %87 = vperm.xlu0 %86, %v57
  %v88 = vpop.permute.xlu0 %87
  %91 = vset.pattern.permute.xlu0 0
  %92 = vperm.xlu0 %91, %v58
  %v93 = vpop.permute.xlu0 %92
  %96 = vset.pattern.permute.xlu0 0
  %97 = vperm.xlu0 %96, %v59
  %v98 = vpop.permute.xlu0 %97
  %101 = vset.pattern.permute.xlu0 0
  %102 = vperm.xlu0 %101, %v60
  %v103 = vpop.permute.xlu0 %102
  %106 = vset.pattern.permute.xlu0 0
  %107 = vperm.xlu0 %106, %v61
  %v108 = vpop.permute.xlu0 %107
  %111 = vset.pattern.permute.xlu0 0
  %112 = vperm.xlu0 %111, %v62
  %v113 = vpop.permute.xlu0 %112
  %116 = vset.pattern.permute.xlu0 0
  %117 = vperm.xlu0 %116, %v63
  %v118 = vpop.permute.xlu0 %117
  %121 = vset.pattern.permute.xlu0 0
  %122 = vperm.xlu0 %121, %v64
  %v123 = vpop.permute.xlu0 %122
  %126 = vset.pattern.permute.xlu0 0
  %127 = vperm.xlu0 %126, %v65
  %v128 = vpop.permute.xlu0 %127
  %131 = vset.pattern.permute.xlu0 0
  %132 = vperm.xlu0 %131, %v66
  %v133 = vpop.permute.xlu0 %132
  %136 = vset.pattern.permute.xlu0 0
  %137 = vperm.xlu0 %136, %v67
  %v138 = vpop.permute.xlu0 %137
  %141 = vset.pattern.permute.xlu0 0
  %142 = vperm.xlu0 %141, %v68
  %v143 = vpop.permute.xlu0 %142
  %146 = vset.pattern.permute.xlu0 0
  %147 = vperm.xlu0 %146, %v69
  %v148 = vpop.permute.xlu0 %147
  %v166 = vunpack.c.l.b16 %v22
  %v167 = vunpack.c.l.b16 %v23
  %v168 = vunpack.c.l.b16 %v24
  %v169 = vunpack.c.l.b16 %v25
  %v170 = vunpack.c.l.b16 %v26
  %v171 = vunpack.c.l.b16 %v27
  %v172 = vunpack.c.l.b16 %v28
  %v173 = vunpack.c.l.b16 %v29
  %v174 = vunpack.c.l.b16 %v30
  %v175 = vunpack.c.l.b16 %v31
  %v176 = vunpack.c.l.b16 %v32
  %v177 = vunpack.c.l.b16 %v33
  %v178 = vunpack.c.l.b16 %v34
  %v179 = vunpack.c.l.b16 %v35
  %v180 = vunpack.c.l.b16 %v36
  %v181 = vunpack.c.l.b16 %v37
  %v182 = vpack.c.b16 %v167, %v166
  %v183 = vpack.c.b16 %v169, %v168
  %v184 = vpack.c.b16 %v171, %v170
  %v185 = vpack.c.b16 %v173, %v172
  %v186 = vpack.c.b16 %v175, %v174
  %v187 = vpack.c.b16 %v177, %v176
  %v188 = vpack.c.b16 %v179, %v178
  %v189 = vpack.c.b16 %v181, %v180
  %v206 = vunpack.c.l.b16 %v38
  %v207 = vunpack.c.l.b16 %v39
  %v208 = vunpack.c.l.b16 %v40
  %v209 = vunpack.c.l.b16 %v41
  %v210 = vunpack.c.l.b16 %v42
  %v211 = vunpack.c.l.b16 %v43
  %v212 = vunpack.c.l.b16 %v44
  %v213 = vunpack.c.l.b16 %v45
  %v214 = vunpack.c.l.b16 %v46
  %v215 = vunpack.c.l.b16 %v47
  %v216 = vunpack.c.l.b16 %v48
  %v217 = vunpack.c.l.b16 %v49
  %v218 = vunpack.c.l.b16 %v50
  %v219 = vunpack.c.l.b16 %v51
  %v220 = vunpack.c.l.b16 %v52
  %v221 = vunpack.c.l.b16 %v53
  %v222 = vpack.c.b16 %v207, %v206
  %v223 = vpack.c.b16 %v209, %v208
  %v224 = vpack.c.b16 %v211, %v210
  %v225 = vpack.c.b16 %v213, %v212
  %v226 = vpack.c.b16 %v215, %v214
  %v227 = vpack.c.b16 %v217, %v216
  %v228 = vpack.c.b16 %v219, %v218
  %v229 = vpack.c.b16 %v221, %v220
  %vm230 = vcmask 261120
  %v232 = vsel %vm230, %v182, 0
  %v235 = vsel %vm230, %v183, 0
  %v238 = vsel %vm230, %v184, 0
  %v241 = vsel %vm230, %v185, 0
  %v244 = vsel %vm230, %v186, 0
  %v247 = vsel %vm230, %v187, 0
  %v250 = vsel %vm230, %v188, 0
  %v253 = vsel %vm230, %v189, 0
  %v256 = vsel %vm230, %v222, 0
  %v259 = vsel %vm230, %v223, 0
  %v262 = vsel %vm230, %v224, 0
  %v265 = vsel %vm230, %v225, 0
  %v268 = vsel %vm230, %v226, 0
  %v271 = vsel %vm230, %v227, 0
  %v274 = vsel %vm230, %v228, 0
  %v277 = vsel %vm230, %v229, 0
  %279 = vmatprep.subr.bf16.mxu0 0
  %280 = vmatpush1.bf16.xpose.msra.mxu0 %v277
  %281 = vmatprep.subr.bf16.mxu0 0
  %282 = vmatpush1.bf16.xpose.msra.mxu0 %v274
  %283 = vmatprep.subr.bf16.mxu0 0
  %284 = vmatpush1.bf16.xpose.msra.mxu0 %v271
  %285 = vmatprep.subr.bf16.mxu0 0
  %286 = vmatpush1.bf16.xpose.msra.mxu0 %v268
  %287 = vmatprep.subr.bf16.mxu0 0
  %288 = vmatpush1.bf16.xpose.msra.mxu0 %v265
  %289 = vmatprep.subr.bf16.mxu0 0
  %290 = vmatpush1.bf16.xpose.msra.mxu0 %v262
  %291 = vmatprep.subr.bf16.mxu0 0
  %292 = vmatpush1.bf16.xpose.msra.mxu0 %v259
  %293 = vmatprep.subr.bf16.mxu0 0
  %294 = vmatpush1.bf16.xpose.msra.mxu0 %v256
  %295 = vmatprep.subr.bf16.mxu0 0
  %296 = vmatpush2.bf16.xpose.msra.mxu0 0
  %297 = vmatprep.subr.bf16.mxu0 0
  %298 = vmatpush2.bf16.xpose.msra.mxu0 0
  %299 = vmatprep.subr.bf16.mxu0 0
  %300 = vmatpush2.bf16.xpose.msra.mxu0 0
  %301 = vmatprep.subr.bf16.mxu0 0
  %302 = vmatpush2.bf16.xpose.msra.mxu0 0
  %303 = vmatprep.subr.bf16.mxu0 0
  %304 = vmatpush2.bf16.xpose.msra.mxu0 0
  %305 = vmatprep.subr.bf16.mxu0 0
  %306 = vmatpush2.bf16.xpose.msra.mxu0 0
  %307 = vmatprep.subr.bf16.mxu0 0
  %308 = vmatpush2.bf16.xpose.msra.mxu0 0
  %309 = vmatprep.subr.bf16.mxu0 0
  %310 = vmatpush2.bf16.xpose.msra.mxu0 0
  %311 = vmatprep.mubr.bf16.mxu0 0
  %312 = vmatmul.mubr.bf16.gmra.mxu0 %v232
  %v313 = vpop.f32.mrf.mxu0
  %v314 = vadd.f32 %v73, %v313
  %v315 = vpop.f32.mrf.mxu0
  %v316 = vpop.f32.mrf.mxu0
  %v317 = vadd.f32 %v78, %v316
  %v318 = vpop.f32.mrf.mxu0
  %319 = vmatprep.mubr.bf16.mxu0 0
  %320 = vmatmul.mubr.bf16.gmra.mxu0 %v235
  %v321 = vpop.f32.mrf.mxu0
  %v322 = vadd.f32 %v83, %v321
  %v323 = vpop.f32.mrf.mxu0
  %v324 = vpop.f32.mrf.mxu0
  %v325 = vadd.f32 %v88, %v324
  %v326 = vpop.f32.mrf.mxu0
  %327 = vmatprep.mubr.bf16.mxu0 0
  %328 = vmatmul.mubr.bf16.gmra.mxu0 %v238
  %v329 = vpop.f32.mrf.mxu0
  %v330 = vadd.f32 %v93, %v329
  %v331 = vpop.f32.mrf.mxu0
  %v332 = vpop.f32.mrf.mxu0
  %v333 = vadd.f32 %v98, %v332
  %v334 = vpop.f32.mrf.mxu0
  %335 = vmatprep.mubr.bf16.mxu0 0
  %336 = vmatmul.mubr.bf16.gmra.mxu0 %v241
  %v337 = vpop.f32.mrf.mxu0
  %v338 = vadd.f32 %v103, %v337
  %v339 = vpop.f32.mrf.mxu0
  %v340 = vpop.f32.mrf.mxu0
  %v341 = vadd.f32 %v108, %v340
  %v342 = vpop.f32.mrf.mxu0
  %343 = vmatprep.mubr.bf16.mxu0 0
  %344 = vmatmul.mubr.bf16.gmra.mxu0 %v244
  %v345 = vpop.f32.mrf.mxu0
  %v346 = vadd.f32 %v113, %v345
  %v347 = vpop.f32.mrf.mxu0
  %v348 = vpop.f32.mrf.mxu0
  %v349 = vadd.f32 %v118, %v348
  %v350 = vpop.f32.mrf.mxu0
  %351 = vmatprep.mubr.bf16.mxu0 0
  %352 = vmatmul.mubr.bf16.gmra.mxu0 %v247
  %v353 = vpop.f32.mrf.mxu0
  %v354 = vadd.f32 %v123, %v353
  %v355 = vpop.f32.mrf.mxu0
  %v356 = vpop.f32.mrf.mxu0
  %v357 = vadd.f32 %v128, %v356
  %v358 = vpop.f32.mrf.mxu0
  %359 = vmatprep.mubr.bf16.mxu0 0
  %360 = vmatmul.mubr.bf16.gmra.mxu0 %v250
  %v361 = vpop.f32.mrf.mxu0
  %v362 = vadd.f32 %v133, %v361
  %v363 = vpop.f32.mrf.mxu0
  %v364 = vpop.f32.mrf.mxu0
  %v365 = vadd.f32 %v138, %v364
  %v366 = vpop.f32.mrf.mxu0
  %367 = vmatprep.mubr.bf16.mxu0 0
  %368 = vmatmul.mubr.bf16.gmra.mxu0 %v253
  %v369 = vpop.f32.mrf.mxu0
  %v370 = vadd.f32 %v143, %v369
  %v371 = vpop.f32.mrf.mxu0
  %v372 = vpop.f32.mrf.mxu0
  %v373 = vadd.f32 %v148, %v372
  %v374 = vpop.f32.mrf.mxu0
  %375 = vdwg.mxu0
  %v376 = vmax.f32 %v314, 0.0
  %v377 = vmax.f32 %v317, 0.0
  %v378 = vmax.f32 %v322, 0.0
  %v379 = vmax.f32 %v325, 0.0
  %v380 = vmax.f32 %v330, 0.0
  %v381 = vmax.f32 %v333, 0.0
  %v382 = vmax.f32 %v338, 0.0
  %v383 = vmax.f32 %v341, 0.0
  %v384 = vmax.f32 %v346, 0.0
  %v385 = vmax.f32 %v349, 0.0
  %v386 = vmax.f32 %v354, 0.0
  %v387 = vmax.f32 %v357, 0.0
  %v388 = vmax.f32 %v362, 0.0
  %v389 = vmax.f32 %v365, 0.0
  %v390 = vmax.f32 %v370, 0.0
  %v391 = vmax.f32 %v373, 0.0
  %v392 = vld [vmem:[%s3] sm:$0xff]
  %v393 = vld [vmem:[%s3 + $0x8] sm:$0xff]
  %v394 = vld [vmem:[%s3 + $0x10] sm:$0xff]
  %v395 = vld [vmem:[%s3 + $0x18] sm:$0xff]
  %v396 = vld [vmem:[%s3 + $0x20] sm:$0xff]
  %v397 = vld [vmem:[%s3 + $0x28] sm:$0xff]
  %v398 = vld [vmem:[%s3 + $0x30] sm:$0xff]
  %v399 = vld [vmem:[%s3 + $0x38] sm:$0xff]
  %v400 = vld [vmem:[%s3 + $0x40] sm:$0xff]
  %v401 = vld [vmem:[%s3 + $0x48] sm:$0xff]
  %v402 = vld [vmem:[%s3 + $0x50] sm:$0xff]
  %v403 = vld [vmem:[%s3 + $0x58] sm:$0xff]
  %v404 = vld [vmem:[%s3 + $0x60] sm:$0xff]
  %v405 = vld [vmem:[%s3 + $0x68] sm:$0xff]
  %v406 = vld [vmem:[%s3 + $0x70] sm:$0xff]
  %v407 = vld [vmem:[%s3 + $0x78] sm:$0xff]
  %409 = vset.pattern.permute.xlu0 0
  %410 = vperm.xlu0 %409, %v392
  %v411 = vpop.permute.xlu0 %410
  %414 = vset.pattern.permute.xlu0 0
  %415 = vperm.xlu0 %414, %v393
  %v416 = vpop.permute.xlu0 %415
  %419 = vset.pattern.permute.xlu0 0
  %420 = vperm.xlu0 %419, %v394
  %v421 = vpop.permute.xlu0 %420
  %424 = vset.pattern.permute.xlu0 0
  %425 = vperm.xlu0 %424, %v395
  %v426 = vpop.permute.xlu0 %425
  %429 = vset.pattern.permute.xlu0 0
  %430 = vperm.xlu0 %429, %v396
  %v431 = vpop.permute.xlu0 %430
  %434 = vset.pattern.permute.xlu0 0
  %435 = vperm.xlu0 %434, %v397
  %v436 = vpop.permute.xlu0 %435
  %439 = vset.pattern.permute.xlu0 0
  %440 = vperm.xlu0 %439, %v398
  %v441 = vpop.permute.xlu0 %440
  %444 = vset.pattern.permute.xlu0 0
  %445 = vperm.xlu0 %444, %v399
  %v446 = vpop.permute.xlu0 %445
  %449 = vset.pattern.permute.xlu0 0
  %450 = vperm.xlu0 %449, %v400
  %v451 = vpop.permute.xlu0 %450
  %454 = vset.pattern.permute.xlu0 0
  %455 = vperm.xlu0 %454, %v401
  %v456 = vpop.permute.xlu0 %455
  %459 = vset.pattern.permute.xlu0 0
  %460 = vperm.xlu0 %459, %v402
  %v461 = vpop.permute.xlu0 %460
  %464 = vset.pattern.permute.xlu0 0
  %465 = vperm.xlu0 %464, %v403
  %v466 = vpop.permute.xlu0 %465
  %469 = vset.pattern.permute.xlu0 0
  %470 = vperm.xlu0 %469, %v404
  %v471 = vpop.permute.xlu0 %470
  %474 = vset.pattern.permute.xlu0 0
  %475 = vperm.xlu0 %474, %v405
  %v476 = vpop.permute.xlu0 %475
  %479 = vset.pattern.permute.xlu0 0
  %480 = vperm.xlu0 %479, %v406
  %v481 = vpop.permute.xlu0 %480
  %484 = vset.pattern.permute.xlu0 0
  %485 = vperm.xlu0 %484, %v407
  %v486 = vpop.permute.xlu0 %485
  %v488 = vmul.f32 %v376, %v411
  %v489 = vmul.f32 %v377, %v416
  %v490 = vmul.f32 %v378, %v421
  %v491 = vmul.f32 %v379, %v426
  %v492 = vmul.f32 %v380, %v431
  %v493 = vmul.f32 %v381, %v436
  %v494 = vmul.f32 %v382, %v441
  %v495 = vmul.f32 %v383, %v446
  %v496 = vmul.f32 %v384, %v451
  %v497 = vmul.f32 %v385, %v456
  %v498 = vmul.f32 %v386, %v461
  %v499 = vmul.f32 %v387, %v466
  %v500 = vmul.f32 %v388, %v471
  %v501 = vmul.f32 %v389, %v476
  %v502 = vmul.f32 %v390, %v481
  %v503 = vmul.f32 %v391, %v486
  %v504 = vadd.f32 %v488, %v489
  %v505 = vadd.f32 %v504, %v490
  %v506 = vadd.f32 %v505, %v491
  %v507 = vadd.f32 %v506, %v492
  %v508 = vadd.f32 %v507, %v493
  %v509 = vadd.f32 %v508, %v494
  %v510 = vadd.f32 %v509, %v495
  %v511 = vadd.f32 %v510, %v496
  %v512 = vadd.f32 %v511, %v497
  %v513 = vadd.f32 %v512, %v498
  %v514 = vadd.f32 %v513, %v499
  %v515 = vadd.f32 %v514, %v500
  %v516 = vadd.f32 %v515, %v501
  %v517 = vadd.f32 %v516, %v502
  %v518 = vadd.f32 %v517, %v503
  %v519 = vrot.slane %v518, 4
  %v520 = vadd.f32 %v518, %v519
  %v521 = vrot.slane %v520, 2
  %v522 = vadd.f32 %v520, %v521
  %v523 = vrot.slane %v522, 1
  %v524 = vadd.f32 %v522, %v523
  %s525 = sld [smem:[#allocation2]]
  %v526 = vstv %s525
  %v527 = vadd.f32 %v524, %v526
  %528 = vst [vmem:[%s5] sm:$0x1] %v527
  // Predicated region
  $region22: #{simple_nn_forward.1} parent=0 // pred_check
    _
  $region23: #{simple_nn_forward.1} parent=0 // pred_check_branch
    %530 = sbr.rel (0) target = $region25
  $region24: #{simple_nn_forward.1} parent=0 // pred_region
    _
  $region25: #{simple_nn_forward.1} parent=0 // pred_fallthru
    _
  // Predicated region
  $region26: #{simple_nn_forward.1} parent=0 // pred_check
    _
  $region27: #{simple_nn_forward.1} parent=0 // pred_check_branch
    %532 = sbr.rel (0) target = $region29
  $region28: #{simple_nn_forward.1} parent=0 // pred_region
    _
  $region29: #{simple_nn_forward.1} parent=0 // pred_fallthru
    _

</llo_original>
